<compile_context>
chip_gen: v5e
topology: v5e:2x2
jax: 0.10.0
libtpu: 0.0.40
codegen_flags: <defaults>
</compile_context>

<pallas_src>
import math

import jax
import jax.numpy as jnp
from jax import lax
from jax.experimental import pallas as pl
from jax.experimental.pallas import tpu as pltpu

# ----------------------------- model config ---------------------------------
B = 2          # batch
S = 8          # sequence length
D = 32         # model dim (d_model)
H = 4          # attention heads
DH = D // H    # per-head dim
DFF = 64       # feed-forward hidden dim
EPS = 1e-5     # layernorm epsilon


def _norm(x):
    """LayerNorm core; the affine (gain/bias) is folded into downstream weights."""
    mu = jnp.mean(x, axis=-1, keepdims=True)
    var = jnp.mean((x - mu) * (x - mu), axis=-1, keepdims=True)
    return (x - mu) * lax.rsqrt(var + EPS)


# --------------------- fused encoder-block kernel ---------------------------
def _encoder_block_kernel(x_ref,
                          wqkv_ref, bqkv_ref, wo_ref, bo_ref,
                          w1_ref, b1_ref, w2_ref, b2_ref,
                          o_ref):
    x = x_ref[...]                                            # (B*S, D) f32

    # ---------------- LN1 -> one wide QKV projection -------------------------
    xn = _norm(x)                                             # (B*S, D)
    qkv = jnp.dot(xn.astype(jnp.bfloat16), wqkv_ref[...],
                  preferred_element_type=jnp.float32) + bqkv_ref[...]   # (B*S, 3D)
    qkv = qkv.reshape(B, S, 3 * D)                            # lane dim unchanged

    # ------- per-head attention (heads regrouped by static lane slices) ------
    ctx_heads = []
    for h in range(H):
        q = qkv[:, :, h * DH:(h + 1) * DH]                    # (B,S,DH); 1/sqrt(DH) pre-folded
        k = qkv[:, :, D + h * DH:D + (h + 1) * DH]            # (B,S,DH)
        v = qkv[:, :, 2 * D + h * DH:2 * D + (h + 1) * DH]    # (B,S,DH)
        s = jnp.einsum('bqd,bkd->bqk', q, k,
                       preferred_element_type=jnp.float32)    # (B,S,S)
        m = jnp.max(s, axis=-1, keepdims=True)
        e = jnp.exp(s - m)
        pr = e * pl.reciprocal(jnp.sum(e, axis=-1, keepdims=True), approx=True)
        ctx_heads.append(jnp.einsum('bqk,bkd->bqd', pr, v,
                                    preferred_element_type=jnp.float32))
    ctx = jnp.concatenate(ctx_heads, axis=-1).reshape(B * S, D)   # (B*S, D)

    # -------- output projection (single K = H*DH contraction) + residual -----
    x1 = x + jnp.dot(ctx.astype(jnp.bfloat16), wo_ref[...],
                     preferred_element_type=jnp.float32) + bo_ref[...]

    # ---------------- LN2 -> feed-forward -> residual ------------------------
    yn = _norm(x1)
    h1 = jnp.dot(yn.astype(jnp.bfloat16), w1_ref[...],
                 preferred_element_type=jnp.float32) + b1_ref[...]
    h1 = jnp.maximum(h1, 0.0)                                 # ReLU
    y = jnp.dot(h1.astype(jnp.bfloat16), w2_ref[...],
                preferred_element_type=jnp.float32) + b2_ref[...]

    o_ref[...] = (x1 + y).astype(o_ref.dtype)


# ------------------------------ wrapper --------------------------------------
_KERNEL_PARAM_ORDER = ("wqkv", "bqkv", "wo", "bo", "w1", "b1", "w2", "b2")


@jax.jit
def encoder_block(x, kp):
    """x: (B, S, D) f32; kp: packed kernel params from pack_params()."""
    x2d = x.reshape(B * S, D)                                 # flattened (16, 32) view
    vmem = pl.BlockSpec(memory_space=pltpu.MemorySpace.VMEM)  # whole array resident in VMEM
    out2d = pl.pallas_call(
        _encoder_block_kernel,
        out_shape=jax.ShapeDtypeStruct((B * S, D), jnp.float32),
        in_specs=[vmem] * (1 + len(_KERNEL_PARAM_ORDER)),
        out_specs=vmem,
    )(x2d, *[kp[k] for k in _KERNEL_PARAM_ORDER])
    return out2d.reshape(B, S, D)


# --------------------------- parameters --------------------------------------
def init_params(key):
    """Unpacked, PyTorch-layout parameters (used by the pure-JAX reference).

    LN gains/biases and all linear biases are randomized so the wrapper-side
    folding/packing is actually exercised against the reference.
    """
    ks = jax.random.split(key, 16)

    def lin(k, fan_in, fan_out):
        return jax.random.normal(k, (fan_in, fan_out), jnp.float32) / math.sqrt(fan_in)

    def vec(k, n, scale=0.1):
        return scale * jax.random.normal(k, (n,), jnp.float32)

    return {
        "ln1_g": 1.0 + vec(ks[0], D), "ln1_b": vec(ks[1], D),
        "wq": lin(ks[2], D, D), "bq": vec(ks[3], D),
        "wk": lin(ks[4], D, D), "bk": vec(ks[5], D),
        "wv": lin(ks[6], D, D), "bv": vec(ks[7], D),
        "wo": lin(ks[8], D, D), "bo": vec(ks[9], D),
        "ln2_g": 1.0 + vec(ks[10], D), "ln2_b": vec(ks[11], D),
        "w1": lin(ks[12], D, DFF), "b1f": vec(ks[13], DFF),
        "w2": lin(ks[14], DFF, D), "b2f": vec(ks[15], D),
    }


def pack_params(p):
    """Wrapper-side layout plumbing + constant folding for the kernel.

    * LN1 gain folded into Wq/Wk/Wv rows; LN1 bias folded into the QKV bias.
    * 1/sqrt(DH) folded into the Q columns / Q bias.
    * LN2 gain folded into W1 rows; LN2 bias folded into the first FFN bias.
    * matmul weights cast to bf16 (MXU operands); biases stay f32.
    """
    inv = 1.0 / math.sqrt(DH)
    g1 = p["ln1_g"][:, None]
    wq = g1 * p["wq"] * inv
    wk = g1 * p["wk"]
    wv = g1 * p["wv"]
    bq = (p["ln1_b"] @ p["wq"] + p["bq"]) * inv
    bk = p["ln1_b"] @ p["wk"] + p["bk"]
    bv = p["ln1_b"] @ p["wv"] + p["bv"]
    w1 = p["ln2_g"][:, None] * p["w1"]
    b1 = p["ln2_b"] @ p["w1"] + p["b1f"]
    return {
        "wqkv": jnp.concatenate([wq, wk, wv], axis=1).astype(jnp.bfloat16),  # (D, 3D)
        "bqkv": jnp.concatenate([bq, bk, bv]).reshape(1, 3 * D),             # (1, 3D) f32
        "wo": p["wo"].astype(jnp.bfloat16),                                  # (D, D)
        "bo": p["bo"].reshape(1, D),
        "w1": w1.astype(jnp.bfloat16),                                       # (D, DFF)
        "b1": b1.reshape(1, DFF),
        "w2": p["w2"].astype(jnp.bfloat16),                                  # (DFF, D)
        "b2": p["b2f"].reshape(1, D),
    }


# ---------------------------- pure-JAX reference ------------------------------
def encoder_block_ref(x, p):
    def ln(z, g, b):
        mu = jnp.mean(z, -1, keepdims=True)
        var = jnp.mean((z - mu) ** 2, -1, keepdims=True)
        return (z - mu) / jnp.sqrt(var + EPS) * g + b

    xn = ln(x, p["ln1_g"], p["ln1_b"])
    q = xn @ p["wq"] + p["bq"]
    k = xn @ p["wk"] + p["bk"]
    v = xn @ p["wv"] + p["bv"]

    def split(t):                                  # (B,S,D) -> (B,H,S,DH)
        return t.reshape(B, S, H, DH).transpose(0, 2, 1, 3)

    qh, kh, vh = split(q), split(k), split(v)
    s = jnp.einsum('bhqd,bhkd->bhqk', qh, kh) / math.sqrt(DH)
    pm = jax.nn.softmax(s, axis=-1)
    ctx = jnp.einsum('bhqk,bhkd->bhqd', pm, vh).transpose(0, 2, 1, 3).reshape(B, S, D)
    x1 = x + ctx @ p["wo"] + p["bo"]

    yn = ln(x1, p["ln2_g"], p["ln2_b"])
    y = jnp.maximum(yn @ p["w1"] + p["b1f"], 0.0) @ p["w2"] + p["b2f"]
    return x1 + y


if __name__ == "__main__":
    key = jax.random.PRNGKey(0)
    k_x, k_p = jax.random.split(key)
    x = jax.random.normal(k_x, (B, S, D), jnp.float32)
    params = init_params(k_p)
    kparams = pack_params(params)

    out = encoder_block(x, kparams)
    jax.block_until_ready(out)
    assert out.shape == (B, S, D) and out.dtype == jnp.float32

    ref = encoder_block_ref(x, params)
    # bf16 MXU operands + approx softmax reciprocal -> ~1e-3..1e-2 abs error.
    assert jnp.allclose(out, ref, atol=2e-2, rtol=2e-2), (
        f"mismatch vs reference: max |err| = {jnp.max(jnp.abs(out - ref))}")
    print("KERNEL_OK")
</pallas_src>

<mosaic_0001>
module attributes {stable_mosaic.version = 11 : i64} {
  func.func @_encoder_block_kernel(%arg0: memref<16x32xf32, #tpu.memory_space<vmem>>, %arg1: memref<32x96xbf16, #tpu.memory_space<vmem>>, %arg2: memref<1x96xf32, #tpu.memory_space<vmem>>, %arg3: memref<32x32xbf16, #tpu.memory_space<vmem>>, %arg4: memref<1x32xf32, #tpu.memory_space<vmem>>, %arg5: memref<32x64xbf16, #tpu.memory_space<vmem>>, %arg6: memref<1x64xf32, #tpu.memory_space<vmem>>, %arg7: memref<64x32xbf16, #tpu.memory_space<vmem>>, %arg8: memref<1x32xf32, #tpu.memory_space<vmem>>, %arg9: memref<16x32xf32, #tpu.memory_space<vmem>>) attributes {dimension_semantics = [], scalar_prefetch = 0 : i64, scratch_operands = 0 : i64, tpu.core_type = #tpu.core_type<tc>} {
    %c0 = arith.constant 0 : index
    %c0_0 = arith.constant 0 : index
    %0 = vector.load %arg0[%c0, %c0_0] : memref<16x32xf32, #tpu.memory_space<vmem>>, vector<16x32xf32>
    %cst = arith.constant dense<0.000000e+00> : vector<16xf32>
    %1 = vector.multi_reduction <add>, %0, %cst [1] : vector<16x32xf32> to vector<16xf32>
    %2 = vector.shape_cast %1 : vector<16xf32> to vector<16x1xf32>
    %cst_1 = arith.constant 3.200000e+01 : f32
    %3 = vector.broadcast %cst_1 : f32 to vector<16x1xf32>
    %4 = arith.divf %2, %3 : vector<16x1xf32>
    %5 = vector.broadcast %4 : vector<16x1xf32> to vector<16x32xf32>
    %6 = arith.subf %0, %5 : vector<16x32xf32>
    %7 = vector.broadcast %4 : vector<16x1xf32> to vector<16x32xf32>
    %8 = arith.subf %0, %7 : vector<16x32xf32>
    %9 = arith.mulf %6, %8 : vector<16x32xf32>
    %cst_2 = arith.constant dense<0.000000e+00> : vector<16xf32>
    %10 = vector.multi_reduction <add>, %9, %cst_2 [1] : vector<16x32xf32> to vector<16xf32>
    %11 = vector.shape_cast %10 : vector<16xf32> to vector<16x1xf32>
    %cst_3 = arith.constant 3.200000e+01 : f32
    %12 = vector.broadcast %cst_3 : f32 to vector<16x1xf32>
    %13 = arith.divf %11, %12 : vector<16x1xf32>
    %14 = vector.broadcast %4 : vector<16x1xf32> to vector<16x32xf32>
    %15 = arith.subf %0, %14 : vector<16x32xf32>
    %cst_4 = arith.constant 9.99999974E-6 : f32
    %16 = vector.broadcast %cst_4 : f32 to vector<16x1xf32>
    %17 = arith.addf %13, %16 : vector<16x1xf32>
    %18 = math.rsqrt %17 : vector<16x1xf32>
    %19 = vector.broadcast %18 : vector<16x1xf32> to vector<16x32xf32>
    %20 = arith.mulf %15, %19 : vector<16x32xf32>
    %21 = arith.truncf %20 : vector<16x32xf32> to vector<16x32xbf16>
    %c0_5 = arith.constant 0 : index
    %c0_6 = arith.constant 0 : index
    %22 = vector.load %arg1[%c0_5, %c0_6] : memref<32x96xbf16, #tpu.memory_space<vmem>>, vector<32x96xbf16>
    %cst_7 = arith.constant dense<0.000000e+00> : vector<16x96xf32>
    %23 = tpu.matmul %21, %22, %cst_7 {dimension_numbers = #tpu.dot_dimension_numbers<[1], [0], [0], [1], [0, 0, 1, 1], [], []>} : vector<16x32xbf16>, vector<32x96xbf16>, vector<16x96xf32> -> vector<16x96xf32>
    %c0_8 = arith.constant 0 : index
    %c0_9 = arith.constant 0 : index
    %24 = vector.load %arg2[%c0_8, %c0_9] : memref<1x96xf32, #tpu.memory_space<vmem>>, vector<1x96xf32>
    %25 = vector.broadcast %24 : vector<1x96xf32> to vector<16x96xf32>
    %26 = arith.addf %23, %25 : vector<16x96xf32>
    %27 = vector.shape_cast %26 : vector<16x96xf32> to vector<2x8x96xf32>
    %28 = vector.extract_strided_slice %27 {offsets = [0, 0, 0], sizes = [2, 8, 8], strides = [1, 1, 1]} : vector<2x8x96xf32> to vector<2x8x8xf32>
    %29 = vector.extract_strided_slice %27 {offsets = [0, 0, 32], sizes = [2, 8, 8], strides = [1, 1, 1]} : vector<2x8x96xf32> to vector<2x8x8xf32>
    %30 = vector.extract_strided_slice %27 {offsets = [0, 0, 64], sizes = [2, 8, 8], strides = [1, 1, 1]} : vector<2x8x96xf32> to vector<2x8x8xf32>
    "tpu.trace_start"() <{level = 10 : i32, message = "bqd,bkd->bqk"}> : () -> ()
    %cst_10 = arith.constant dense<0.000000e+00> : vector<2x8x8xf32>
    %31 = tpu.matmul %28, %29, %cst_10 {dimension_numbers = #tpu.dot_dimension_numbers<[2], [2], [1], [1], [0, 0, 0, 1, 1, 1], [0], [0]>} : vector<2x8x8xf32>, vector<2x8x8xf32>, vector<2x8x8xf32> -> vector<2x8x8xf32>
    "tpu.trace_stop"() : () -> ()
    %cst_11 = arith.constant dense<0xFF800000> : vector<2x8xf32>
    %32 = vector.multi_reduction <maximumf>, %31, %cst_11 [2] : vector<2x8x8xf32> to vector<2x8xf32>
    %33 = vector.shape_cast %32 : vector<2x8xf32> to vector<2x8x1xf32>
    %34 = vector.broadcast %33 : vector<2x8x1xf32> to vector<2x8x8xf32>
    %35 = arith.subf %31, %34 : vector<2x8x8xf32>
    %36 = math.exp %35 : vector<2x8x8xf32>
    %cst_12 = arith.constant dense<0.000000e+00> : vector<2x8xf32>
    %37 = vector.multi_reduction <add>, %36, %cst_12 [2] : vector<2x8x8xf32> to vector<2x8xf32>
    %38 = vector.shape_cast %37 : vector<2x8xf32> to vector<2x8x1xf32>
    %39 = tpu.reciprocal %38 {approx = true} : vector<2x8x1xf32> -> vector<2x8x1xf32>
    %40 = vector.broadcast %39 : vector<2x8x1xf32> to vector<2x8x8xf32>
    %41 = arith.mulf %36, %40 : vector<2x8x8xf32>
    "tpu.trace_start"() <{level = 10 : i32, message = "bqk,bkd->bqd"}> : () -> ()
    %cst_13 = arith.constant dense<0.000000e+00> : vector<2x8x8xf32>
    %42 = tpu.matmul %41, %30, %cst_13 {dimension_numbers = #tpu.dot_dimension_numbers<[2], [1], [1], [2], [0, 0, 0, 1, 1, 2], [0], [0]>} : vector<2x8x8xf32>, vector<2x8x8xf32>, vector<2x8x8xf32> -> vector<2x8x8xf32>
    "tpu.trace_stop"() : () -> ()
    %43 = vector.extract_strided_slice %27 {offsets = [0, 0, 8], sizes = [2, 8, 8], strides = [1, 1, 1]} : vector<2x8x96xf32> to vector<2x8x8xf32>
    %44 = vector.extract_strided_slice %27 {offsets = [0, 0, 40], sizes = [2, 8, 8], strides = [1, 1, 1]} : vector<2x8x96xf32> to vector<2x8x8xf32>
    %45 = vector.extract_strided_slice %27 {offsets = [0, 0, 72], sizes = [2, 8, 8], strides = [1, 1, 1]} : vector<2x8x96xf32> to vector<2x8x8xf32>
    "tpu.trace_start"() <{level = 10 : i32, message = "bqd,bkd->bqk"}> : () -> ()
    %cst_14 = arith.constant dense<0.000000e+00> : vector<2x8x8xf32>
    %46 = tpu.matmul %43, %44, %cst_14 {dimension_numbers = #tpu.dot_dimension_numbers<[2], [2], [1], [1], [0, 0, 0, 1, 1, 1], [0], [0]>} : vector<2x8x8xf32>, vector<2x8x8xf32>, vector<2x8x8xf32> -> vector<2x8x8xf32>
    "tpu.trace_stop"() : () -> ()
    %cst_15 = arith.constant dense<0xFF800000> : vector<2x8xf32>
    %47 = vector.multi_reduction <maximumf>, %46, %cst_15 [2] : vector<2x8x8xf32> to vector<2x8xf32>
    %48 = vector.shape_cast %47 : vector<2x8xf32> to vector<2x8x1xf32>
    %49 = vector.broadcast %48 : vector<2x8x1xf32> to vector<2x8x8xf32>
    %50 = arith.subf %46, %49 : vector<2x8x8xf32>
    %51 = math.exp %50 : vector<2x8x8xf32>
    %cst_16 = arith.constant dense<0.000000e+00> : vector<2x8xf32>
    %52 = vector.multi_reduction <add>, %51, %cst_16 [2] : vector<2x8x8xf32> to vector<2x8xf32>
    %53 = vector.shape_cast %52 : vector<2x8xf32> to vector<2x8x1xf32>
    %54 = tpu.reciprocal %53 {approx = true} : vector<2x8x1xf32> -> vector<2x8x1xf32>
    %55 = vector.broadcast %54 : vector<2x8x1xf32> to vector<2x8x8xf32>
    %56 = arith.mulf %51, %55 : vector<2x8x8xf32>
    "tpu.trace_start"() <{level = 10 : i32, message = "bqk,bkd->bqd"}> : () -> ()
    %cst_17 = arith.constant dense<0.000000e+00> : vector<2x8x8xf32>
    %57 = tpu.matmul %56, %45, %cst_17 {dimension_numbers = #tpu.dot_dimension_numbers<[2], [1], [1], [2], [0, 0, 0, 1, 1, 2], [0], [0]>} : vector<2x8x8xf32>, vector<2x8x8xf32>, vector<2x8x8xf32> -> vector<2x8x8xf32>
    "tpu.trace_stop"() : () -> ()
    %58 = vector.extract_strided_slice %27 {offsets = [0, 0, 16], sizes = [2, 8, 8], strides = [1, 1, 1]} : vector<2x8x96xf32> to vector<2x8x8xf32>
    %59 = vector.extract_strided_slice %27 {offsets = [0, 0, 48], sizes = [2, 8, 8], strides = [1, 1, 1]} : vector<2x8x96xf32> to vector<2x8x8xf32>
    %60 = vector.extract_strided_slice %27 {offsets = [0, 0, 80], sizes = [2, 8, 8], strides = [1, 1, 1]} : vector<2x8x96xf32> to vector<2x8x8xf32>
    "tpu.trace_start"() <{level = 10 : i32, message = "bqd,bkd->bqk"}> : () -> ()
    %cst_18 = arith.constant dense<0.000000e+00> : vector<2x8x8xf32>
    %61 = tpu.matmul %58, %59, %cst_18 {dimension_numbers = #tpu.dot_dimension_numbers<[2], [2], [1], [1], [0, 0, 0, 1, 1, 1], [0], [0]>} : vector<2x8x8xf32>, vector<2x8x8xf32>, vector<2x8x8xf32> -> vector<2x8x8xf32>
    "tpu.trace_stop"() : () -> ()
    %cst_19 = arith.constant dense<0xFF800000> : vector<2x8xf32>
    %62 = vector.multi_reduction <maximumf>, %61, %cst_19 [2] : vector<2x8x8xf32> to vector<2x8xf32>
    %63 = vector.shape_cast %62 : vector<2x8xf32> to vector<2x8x1xf32>
    %64 = vector.broadcast %63 : vector<2x8x1xf32> to vector<2x8x8xf32>
    %65 = arith.subf %61, %64 : vector<2x8x8xf32>
    %66 = math.exp %65 : vector<2x8x8xf32>
    %cst_20 = arith.constant dense<0.000000e+00> : vector<2x8xf32>
    %67 = vector.multi_reduction <add>, %66, %cst_20 [2] : vector<2x8x8xf32> to vector<2x8xf32>
    %68 = vector.shape_cast %67 : vector<2x8xf32> to vector<2x8x1xf32>
    %69 = tpu.reciprocal %68 {approx = true} : vector<2x8x1xf32> -> vector<2x8x1xf32>
    %70 = vector.broadcast %69 : vector<2x8x1xf32> to vector<2x8x8xf32>
    %71 = arith.mulf %66, %70 : vector<2x8x8xf32>
    "tpu.trace_start"() <{level = 10 : i32, message = "bqk,bkd->bqd"}> : () -> ()
    %cst_21 = arith.constant dense<0.000000e+00> : vector<2x8x8xf32>
    %72 = tpu.matmul %71, %60, %cst_21 {dimension_numbers = #tpu.dot_dimension_numbers<[2], [1], [1], [2], [0, 0, 0, 1, 1, 2], [0], [0]>} : vector<2x8x8xf32>, vector<2x8x8xf32>, vector<2x8x8xf32> -> vector<2x8x8xf32>
    "tpu.trace_stop"() : () -> ()
    %73 = vector.extract_strided_slice %27 {offsets = [0, 0, 24], sizes = [2, 8, 8], strides = [1, 1, 1]} : vector<2x8x96xf32> to vector<2x8x8xf32>
    %74 = vector.extract_strided_slice %27 {offsets = [0, 0, 56], sizes = [2, 8, 8], strides = [1, 1, 1]} : vector<2x8x96xf32> to vector<2x8x8xf32>
    %75 = vector.extract_strided_slice %27 {offsets = [0, 0, 88], sizes = [2, 8, 8], strides = [1, 1, 1]} : vector<2x8x96xf32> to vector<2x8x8xf32>
    "tpu.trace_start"() <{level = 10 : i32, message = "bqd,bkd->bqk"}> : () -> ()
    %cst_22 = arith.constant dense<0.000000e+00> : vector<2x8x8xf32>
    %76 = tpu.matmul %73, %74, %cst_22 {dimension_numbers = #tpu.dot_dimension_numbers<[2], [2], [1], [1], [0, 0, 0, 1, 1, 1], [0], [0]>} : vector<2x8x8xf32>, vector<2x8x8xf32>, vector<2x8x8xf32> -> vector<2x8x8xf32>
    "tpu.trace_stop"() : () -> ()
    %cst_23 = arith.constant dense<0xFF800000> : vector<2x8xf32>
    %77 = vector.multi_reduction <maximumf>, %76, %cst_23 [2] : vector<2x8x8xf32> to vector<2x8xf32>
    %78 = vector.shape_cast %77 : vector<2x8xf32> to vector<2x8x1xf32>
    %79 = vector.broadcast %78 : vector<2x8x1xf32> to vector<2x8x8xf32>
    %80 = arith.subf %76, %79 : vector<2x8x8xf32>
    %81 = math.exp %80 : vector<2x8x8xf32>
    %cst_24 = arith.constant dense<0.000000e+00> : vector<2x8xf32>
    %82 = vector.multi_reduction <add>, %81, %cst_24 [2] : vector<2x8x8xf32> to vector<2x8xf32>
    %83 = vector.shape_cast %82 : vector<2x8xf32> to vector<2x8x1xf32>
    %84 = tpu.reciprocal %83 {approx = true} : vector<2x8x1xf32> -> vector<2x8x1xf32>
    %85 = vector.broadcast %84 : vector<2x8x1xf32> to vector<2x8x8xf32>
    %86 = arith.mulf %81, %85 : vector<2x8x8xf32>
    "tpu.trace_start"() <{level = 10 : i32, message = "bqk,bkd->bqd"}> : () -> ()
    %cst_25 = arith.constant dense<0.000000e+00> : vector<2x8x8xf32>
    %87 = tpu.matmul %86, %75, %cst_25 {dimension_numbers = #tpu.dot_dimension_numbers<[2], [1], [1], [2], [0, 0, 0, 1, 1, 2], [0], [0]>} : vector<2x8x8xf32>, vector<2x8x8xf32>, vector<2x8x8xf32> -> vector<2x8x8xf32>
    "tpu.trace_stop"() : () -> ()
    %88 = tpu.concatenate %42, %57, %72, %87 in 2 : vector<2x8x8xf32>, vector<2x8x8xf32>, vector<2x8x8xf32>, vector<2x8x8xf32> -> vector<2x8x32xf32>
    %89 = vector.shape_cast %88 : vector<2x8x32xf32> to vector<16x32xf32>
    %90 = arith.truncf %89 : vector<16x32xf32> to vector<16x32xbf16>
    %c0_26 = arith.constant 0 : index
    %c0_27 = arith.constant 0 : index
    %91 = vector.load %arg3[%c0_26, %c0_27] : memref<32x32xbf16, #tpu.memory_space<vmem>>, vector<32x32xbf16>
    %cst_28 = arith.constant dense<0.000000e+00> : vector<16x32xf32>
    %92 = tpu.matmul %90, %91, %cst_28 {dimension_numbers = #tpu.dot_dimension_numbers<[1], [0], [0], [1], [0, 0, 1, 1], [], []>} : vector<16x32xbf16>, vector<32x32xbf16>, vector<16x32xf32> -> vector<16x32xf32>
    %93 = arith.addf %0, %92 : vector<16x32xf32>
    %c0_29 = arith.constant 0 : index
    %c0_30 = arith.constant 0 : index
    %94 = vector.load %arg4[%c0_29, %c0_30] : memref<1x32xf32, #tpu.memory_space<vmem>>, vector<1x32xf32>
    %95 = vector.broadcast %94 : vector<1x32xf32> to vector<16x32xf32>
    %96 = arith.addf %93, %95 : vector<16x32xf32>
    %cst_31 = arith.constant dense<0.000000e+00> : vector<16xf32>
    %97 = vector.multi_reduction <add>, %96, %cst_31 [1] : vector<16x32xf32> to vector<16xf32>
    %98 = vector.shape_cast %97 : vector<16xf32> to vector<16x1xf32>
    %cst_32 = arith.constant 3.200000e+01 : f32
    %99 = vector.broadcast %cst_32 : f32 to vector<16x1xf32>
    %100 = arith.divf %98, %99 : vector<16x1xf32>
    %101 = vector.broadcast %100 : vector<16x1xf32> to vector<16x32xf32>
    %102 = arith.subf %96, %101 : vector<16x32xf32>
    %103 = vector.broadcast %100 : vector<16x1xf32> to vector<16x32xf32>
    %104 = arith.subf %96, %103 : vector<16x32xf32>
    %105 = arith.mulf %102, %104 : vector<16x32xf32>
    %cst_33 = arith.constant dense<0.000000e+00> : vector<16xf32>
    %106 = vector.multi_reduction <add>, %105, %cst_33 [1] : vector<16x32xf32> to vector<16xf32>
    %107 = vector.shape_cast %106 : vector<16xf32> to vector<16x1xf32>
    %cst_34 = arith.constant 3.200000e+01 : f32
    %108 = vector.broadcast %cst_34 : f32 to vector<16x1xf32>
    %109 = arith.divf %107, %108 : vector<16x1xf32>
    %110 = vector.broadcast %100 : vector<16x1xf32> to vector<16x32xf32>
    %111 = arith.subf %96, %110 : vector<16x32xf32>
    %cst_35 = arith.constant 9.99999974E-6 : f32
    %112 = vector.broadcast %cst_35 : f32 to vector<16x1xf32>
    %113 = arith.addf %109, %112 : vector<16x1xf32>
    %114 = math.rsqrt %113 : vector<16x1xf32>
    %115 = vector.broadcast %114 : vector<16x1xf32> to vector<16x32xf32>
    %116 = arith.mulf %111, %115 : vector<16x32xf32>
    %117 = arith.truncf %116 : vector<16x32xf32> to vector<16x32xbf16>
    %c0_36 = arith.constant 0 : index
    %c0_37 = arith.constant 0 : index
    %118 = vector.load %arg5[%c0_36, %c0_37] : memref<32x64xbf16, #tpu.memory_space<vmem>>, vector<32x64xbf16>
    %cst_38 = arith.constant dense<0.000000e+00> : vector<16x64xf32>
    %119 = tpu.matmul %117, %118, %cst_38 {dimension_numbers = #tpu.dot_dimension_numbers<[1], [0], [0], [1], [0, 0, 1, 1], [], []>} : vector<16x32xbf16>, vector<32x64xbf16>, vector<16x64xf32> -> vector<16x64xf32>
    %c0_39 = arith.constant 0 : index
    %c0_40 = arith.constant 0 : index
    %120 = vector.load %arg6[%c0_39, %c0_40] : memref<1x64xf32, #tpu.memory_space<vmem>>, vector<1x64xf32>
    %121 = vector.broadcast %120 : vector<1x64xf32> to vector<16x64xf32>
    %122 = arith.addf %119, %121 : vector<16x64xf32>
    %cst_41 = arith.constant 0.000000e+00 : f32
    %123 = vector.broadcast %cst_41 : f32 to vector<16x64xf32>
    %124 = arith.maximumf %122, %123 : vector<16x64xf32>
    %125 = arith.truncf %124 : vector<16x64xf32> to vector<16x64xbf16>
    %c0_42 = arith.constant 0 : index
    %c0_43 = arith.constant 0 : index
    %126 = vector.load %arg7[%c0_42, %c0_43] : memref<64x32xbf16, #tpu.memory_space<vmem>>, vector<64x32xbf16>
    %cst_44 = arith.constant dense<0.000000e+00> : vector<16x32xf32>
    %127 = tpu.matmul %125, %126, %cst_44 {dimension_numbers = #tpu.dot_dimension_numbers<[1], [0], [0], [1], [0, 0, 1, 1], [], []>} : vector<16x64xbf16>, vector<64x32xbf16>, vector<16x32xf32> -> vector<16x32xf32>
    %c0_45 = arith.constant 0 : index
    %c0_46 = arith.constant 0 : index
    %128 = vector.load %arg8[%c0_45, %c0_46] : memref<1x32xf32, #tpu.memory_space<vmem>>, vector<1x32xf32>
    %129 = vector.broadcast %128 : vector<1x32xf32> to vector<16x32xf32>
    %130 = arith.addf %127, %129 : vector<16x32xf32>
    %131 = arith.addf %96, %130 : vector<16x32xf32>
    %c0_47 = arith.constant 0 : index
    %c0_48 = arith.constant 0 : index
    %132 = vector.load %arg9[%c0_47, %c0_48] : memref<16x32xf32, #tpu.memory_space<vmem>>, vector<16x32xf32>
    tpu.vector_store %arg9[%c0_47, %c0_48], %131 {strides = array<i32>} : memref<16x32xf32, #tpu.memory_space<vmem>>, vector<16x32xf32>,
    return
  }
}

</mosaic_0001>

<llo_original>
// kernel: encoder_block.1
$region0: #{encoder_block.1}
  #allocation0 [shape = 'u32[]', space=smem, size = 0x4, offset = 0x4, fixed_abs, tag = 'smem constant byte address 0x4 - core index']
  #allocation1 [shape = 'u32[72,128]{1,0:T(1,128)}', space=vmem, size = 0x9000, scoped, tag = 'internal scratch']
  %s0 = inlined_call_operand.vmem [shape: f32[16,32], index: 0, kind: input, shape index: {}]
  %s1 = inlined_call_operand.vmem [shape: bf16[32,96], index: 1, kind: input, shape index: {}]
  %s2 = inlined_call_operand.vmem [shape: f32[1,96], index: 2, kind: input, shape index: {}]
  %s3 = inlined_call_operand.vmem [shape: bf16[32,32], index: 3, kind: input, shape index: {}]
  %s4 = inlined_call_operand.vmem [shape: f32[1,32], index: 4, kind: input, shape index: {}]
  %s5 = inlined_call_operand.hbm [shape: bf16[32,64], index: 5, kind: input, shape index: {}]
  %s6 = inlined_call_operand.hbm [shape: f32[1,64], index: 6, kind: input, shape index: {}]
  %s7 = inlined_call_operand.vmem [shape: bf16[64,32], index: 7, kind: input, shape index: {}]
  %s8 = inlined_call_operand.hbm [shape: f32[1,32], index: 8, kind: input, shape index: {}]
  %s9 = inlined_call_operand.hbm [shape: f32[16,32], index: 9, kind: output, shape index: {}]
  %s10 = sld [smem:[#allocation0]]
  $region58: #{encoder_block.1} parent=0
    _
  %s12 = ssub.s32 1, %s10
  %s13 = scalar_select 0, %s12, %s10
  $region1: #{encoder_block.1} parent=0
    #allocation2 [shape = 'u8[8192]{0}', space=vmem, size = 0x2000, scoped, tag = 'input window, operand 5, single buffered']
    #allocation3 [shape = 's32[1]{0}', space=sflag, size = 0x4, scoped, tag = 'scoped memory for encoder_block.1']
    #allocation4 [shape = 's32[1]{0}', space=sflag, size = 0x4, scoped, tag = 'scoped memory for encoder_block.1']
    #allocation5 [shape = 'u8[512]{0}', space=vmem, size = 0x400, scoped, tag = 'input window, operand 6, single buffered']
    #allocation6 [shape = 's32[1]{0}', space=sflag, size = 0x4, scoped, tag = 'scoped memory for encoder_block.1']
    #allocation7 [shape = 'u8[512]{0}', space=vmem, size = 0x400, scoped, tag = 'input window, operand 8, single buffered']
    #allocation8 [shape = 'u8[8192]{0}', space=vmem, size = 0x2000, scoped, tag = 'output window, operand 0, single buffered']
    %14 = vsyncpa [#allocation3], 0
    %15 = vsyncpa [#allocation6], 0
    %16 = vsyncpa [#allocation4], 0
    // Predicated region
    $region2: #{encoder_block.1} parent=1 // pred_check
      _
    $region3: #{encoder_block.1} parent=1 // pred_check_branch
      %18 = sbr.rel (0) target = $region5
    $region4: #{encoder_block.1} parent=1 // pred_region
      _
    $region5: #{encoder_block.1} parent=1 // pred_fallthru
      _
    // Predicated region
    $region6: #{encoder_block.1} parent=1 // pred_check
      _
    $region7: #{encoder_block.1} parent=1 // pred_check_branch
      %20 = sbr.rel (0) target = $region9
    $region8: #{encoder_block.1} parent=1 // pred_region
      _
    $region9: #{encoder_block.1} parent=1 // pred_fallthru
      _
    // Predicated region
    $region10: #{encoder_block.1} parent=1 // pred_check
      _
    $region11: #{encoder_block.1} parent=1 // pred_check_branch
      %22 = sbr.rel (0) target = $region13
    $region12: #{encoder_block.1} parent=1 // pred_region
      _
    $region13: #{encoder_block.1} parent=1 // pred_fallthru
      _
    // Predicated region
    $region14: #{encoder_block.1} parent=1 // pred_check
      _
    $region15: #{encoder_block.1} parent=1 // pred_check_branch
      %24 = sbr.rel (0) target = $region17
    $region16: #{encoder_block.1} parent=1 // pred_region
      _
    $region17: #{encoder_block.1} parent=1 // pred_fallthru
      _
    // Predicated region
    $region18: #{encoder_block.1} parent=1 // pred_check
      _
    $region19: #{encoder_block.1} parent=1 // pred_check_branch
      %26 = sbr.rel (0) target = $region21
    $region20: #{encoder_block.1} parent=1 // pred_region
      _
    $region21: #{encoder_block.1} parent=1 // pred_fallthru
      _
    // Predicated region
    $region22: #{encoder_block.1} parent=1 // pred_check
      _
    $region23: #{encoder_block.1} parent=1 // pred_check_branch
      %28 = sbr.rel (0) target = $region25
    $region24: #{encoder_block.1} parent=1 // pred_region
      %30 = vsyncadd [#allocation3], 0
      %s31 = sshll.u32 %s5, 4
      %s32 = int_to_ptr.hbm [resolvable:$true] %s31
      %s33 = sshll.u32 [#allocation2], 4
      %s34 = int_to_ptr.vmem [resolvable:$true] %s33
      %39 = dma.hbm_to_vmem [thread:$0]  %s32, 256, %s34, [#allocation3], 64, 64, 4
    $region25: #{encoder_block.1} parent=1 // pred_fallthru
      _
    // Predicated region
    $region26: #{encoder_block.1} parent=1 // pred_check
      _
    $region27: #{encoder_block.1} parent=1 // pred_check_branch
      %41 = sbr.rel (0) target = $region29
    $region28: #{encoder_block.1} parent=1 // pred_region
      %43 = vsyncadd [#allocation6], 0
      %s45 = sshll.u32 %s6, 4
      %s46 = int_to_ptr.hbm [resolvable:$true] %s45
      %s47 = sshll.u32 [#allocation5], 4
      %s48 = int_to_ptr.vmem [resolvable:$true] %s47
      %50 = dma.hbm_to_vmem [thread:$0]  %s46, 16, %s48, [#allocation6]
    $region29: #{encoder_block.1} parent=1 // pred_fallthru
      _
    // Predicated region
    $region30: #{encoder_block.1} parent=1 // pred_check
      _
    $region31: #{encoder_block.1} parent=1 // pred_check_branch
      %52 = sbr.rel (0) target = $region33
    $region32: #{encoder_block.1} parent=1 // pred_region
      _
    $region33: #{encoder_block.1} parent=1 // pred_fallthru
      _
    // Predicated region
    $region34: #{encoder_block.1} parent=1 // pred_check
      _
    $region35: #{encoder_block.1} parent=1 // pred_check_branch
      %54 = sbr.rel (0) target = $region37
    $region36: #{encoder_block.1} parent=1 // pred_region
      %56 = vsyncadd [#allocation6], 0
      %s58 = sshll.u32 %s8, 4
      %s59 = int_to_ptr.hbm [resolvable:$true] %s58
      %s60 = sshll.u32 [#allocation7], 4
      %s61 = int_to_ptr.vmem [resolvable:$true] %s60
      %63 = dma.hbm_to_vmem [thread:$0]  %s59, 16, %s61, [#allocation6]
    $region37: #{encoder_block.1} parent=1 // pred_fallthru
      _
    // Predicated region
    $region38: #{encoder_block.1} parent=1 // pred_check
      _
    $region39: #{encoder_block.1} parent=1 // pred_check_branch
      %65 = sbr.rel (0) target = $region41
    $region40: #{encoder_block.1} parent=1 // pred_region
      %67 = dma.done [#allocation3], 256
    $region41: #{encoder_block.1} parent=1 // pred_fallthru
      _
    // Predicated region
    $region42: #{encoder_block.1} parent=1 // pred_check
      _
    $region43: #{encoder_block.1} parent=1 // pred_check_branch
      %69 = sbr.rel (0) target = $region45
    $region44: #{encoder_block.1} parent=1 // pred_region
      %71 = dma.done [#allocation6], 16
    $region45: #{encoder_block.1} parent=1 // pred_fallthru
      _
    // Predicated region
    $region46: #{encoder_block.1} parent=1 // pred_check
      _
    $region47: #{encoder_block.1} parent=1 // pred_check_branch
      %73 = sbr.rel (0) target = $region49
    $region48: #{encoder_block.1} parent=1 // pred_region
      %75 = dma.done [#allocation6], 16
    $region49: #{encoder_block.1} parent=1 // pred_fallthru
      _
    %v77 = vld [vmem:[%s0] sm:$0xff]
    %v78 = vld [vmem:[%s0 + $0x8] sm:$0xff]
    %vm79 = vcmask 261120
    %v80 = vsel %vm79, %v77, 0.0
    %81 = vadd.xlane.f32.xlu0 %v80
    %v82 = vpop.xlane.xlu0 %81
    %v83 = vsel %vm79, %v78, 0.0
    %84 = vadd.xlane.f32.xlu0 %v83
    %v85 = vpop.xlane.xlu0 %84
    %v86 = vrcp.pop 32.0
    %v87 = vmul.f32 32.0, %v86
    %v88 = vsub.f32 1.0, %v87
    %v89 = vmul.f32 %v86, %v88
    %v90 = vadd.f32 %v86, %v89
    %vm91 = vweird.f32 %v86
    %v92 = vsel %vm91, %v86, %v90
    %v93 = vmul.f32 %v82, %v92
    %v94 = vmul.f32 %v85, %v92
    %v95 = vsub.f32 %v77, %v93
    %v96 = vsub.f32 %v78, %v94
    %v97 = vmul.f32 %v95, %v95
    %v98 = vmul.f32 %v96, %v96
    %v99 = vsel %vm79, %v97, 0.0
    %100 = vadd.xlane.f32.xlu0 %v99
    %v101 = vpop.xlane.xlu0 %100
    %v102 = vsel %vm79, %v98, 0.0
    %103 = vadd.xlane.f32.xlu0 %v102
    %v104 = vpop.xlane.xlu0 %103
    %v105 = vmul.f32 %v101, %v92
    %v106 = vmul.f32 %v104, %v92
    %v107 = vadd.f32 %v105, 1e-05
    %v108 = vadd.f32 %v106, 1e-05
    %v109 = vrsqrt.pop %v107
    %v110 = vmul.f32 %v109, %v107
    %v111 = vmul.f32 %v110, %v109
    %v112 = vmul.f32 0.5, %v111
    %v113 = vsub.f32 1.5, %v112
    %v114 = vmul.f32 %v109, %v113
    %vm115 = vweird.f32 %v107
    %vm116 = vweird.f32 %v109
    %vm117 = vmor %vm115, %vm116
    %v118 = vsel %vm117, %v109, %v114
    %v119 = vrsqrt.pop %v108
    %v120 = vmul.f32 %v119, %v108
    %v121 = vmul.f32 %v120, %v119
    %v122 = vmul.f32 0.5, %v121
    %v123 = vsub.f32 1.5, %v122
    %v124 = vmul.f32 %v119, %v123
    %vm125 = vweird.f32 %v108
    %vm126 = vweird.f32 %v119
    %vm127 = vmor %vm125, %vm126
    %v128 = vsel %vm127, %v119, %v124
    %v129 = vmul.f32 %v95, %v118
    %v130 = vmul.f32 %v96, %v128
    %v131 = vpack.c.bf16 %v130, %v129
    %v132 = vld [vmem:[%s1] sm:$0xf]
    %v133 = vld [vmem:[%s1 + $0x4] sm:$0xf]
    %v134 = vld [vmem:[%s1 + $0x8] sm:$0xf]
    %v135 = vld [vmem:[%s1 + $0xc] sm:$0xf]
    %v136 = vld [vmem:[%s2] sm:$0x1]
    %v138 = vperm.slane %v136, 0
    %v144 = vunpack.c.l.b16 %v132
    %v145 = vunpack.c.l.b16 %v133
    %v146 = vunpack.c.l.b16 %v134
    %v147 = vunpack.c.l.b16 %v135
    %v148 = vpack.c.b16 %v145, %v144
    %v149 = vpack.c.b16 %v147, %v146
    %v153 = vsel %vm79, %v131, 0
    %155 = vmatpush.bf16.msra.mxu0 0
    %156 = vmatpush.bf16.msra.mxu0 0
    %157 = vmatpush.bf16.msra.mxu0 0
    %158 = vmatpush.bf16.msra.mxu0 0
    %159 = vmatpush.bf16.msra.mxu0 0
    %160 = vmatpush.bf16.msra.mxu0 0
    %161 = vmatpush.bf16.msra.mxu0 %v149
    %162 = vmatpush.bf16.msra.mxu0 %v148
    %163 = vmatmul.bf16.gmra.mxu0 %v153
    %v164 = vpop.f32.mrf.mxu0
    %v165 = vadd.f32 %v138, %v164
    %v166 = vpop.f32.mrf.mxu0
    %v167 = vadd.f32 %v138, %v166
    %168 = vdwg.mxu0
    %170 = vrot.lane.b32.xlu0 %v165, 96
    %v171 = vpop.permute.xlu0 %170
    %vm172 = vcmask 64512
    %v173 = vsel %vm172, %v165, 0
    %v175 = vsel %vm172, %v171, 0
    %177 = vmatpush.xpose.msra.mxu0 0.0
    %178 = vmatpush.xpose.msra.mxu0 0.0
    %179 = vmatpush.xpose.msra.mxu0 0.0
    %180 = vmatpush.xpose.msra.mxu0 0.0
    %181 = vmatpush.xpose.msra.mxu0 0.0
    %182 = vmatpush.xpose.msra.mxu0 0.0
    %183 = vmatpush.xpose.msra.mxu0 0.0
    %184 = vmatpush.xpose.msra.mxu0 0.0
    %185 = vmatpush.xpose.msra.mxu0 0.0
    %186 = vmatpush.xpose.msra.mxu0 0.0
    %187 = vmatpush.xpose.msra.mxu0 0.0
    %188 = vmatpush.xpose.msra.mxu0 0.0
    %189 = vmatpush.xpose.msra.mxu0 0.0
    %190 = vmatpush.xpose.msra.mxu0 0.0
    %191 = vmatpush.xpose.msra.mxu0 0.0
    %192 = vmatpush.xpose.msra.mxu0 %v175
    %193 = vmatmul.f32.gmra.mxu0 %v173
    %v194 = vpop.f32.mrf.mxu0
    %v195 = vadd.f32 0.0, %v194
    %196 = vdwg.mxu0
    %198 = vrot.lane.b32.xlu0 %v167, 96
    %v199 = vpop.permute.xlu0 %198
    %v200 = vsel %vm172, %v167, 0
    %v202 = vsel %vm172, %v199, 0
    %204 = vmatpush.xpose.msra.mxu0 0.0
    %205 = vmatpush.xpose.msra.mxu0 0.0
    %206 = vmatpush.xpose.msra.mxu0 0.0
    %207 = vmatpush.xpose.msra.mxu0 0.0
    %208 = vmatpush.xpose.msra.mxu0 0.0
    %209 = vmatpush.xpose.msra.mxu0 0.0
    %210 = vmatpush.xpose.msra.mxu0 0.0
    %211 = vmatpush.xpose.msra.mxu0 0.0
    %212 = vmatpush.xpose.msra.mxu0 0.0
    %213 = vmatpush.xpose.msra.mxu0 0.0
    %214 = vmatpush.xpose.msra.mxu0 0.0
    %215 = vmatpush.xpose.msra.mxu0 0.0
    %216 = vmatpush.xpose.msra.mxu0 0.0
    %217 = vmatpush.xpose.msra.mxu0 0.0
    %218 = vmatpush.xpose.msra.mxu0 0.0
    %219 = vmatpush.xpose.msra.mxu0 %v202
    %220 = vmatmul.f32.gmra.mxu0 %v200
    %v221 = vpop.f32.mrf.mxu0
    %v222 = vadd.f32 0.0, %v221
    %223 = vdwg.mxu0
    %v224 = vsel %vm172, %v195, -inf
    %225 = vmax.xlane.f32.xlu0 %v224
    %v226 = vpop.xlane.xlu0 %225
    %v227 = vsel %vm172, %v222, -inf
    %228 = vmax.xlane.f32.xlu0 %v227
    %v229 = vpop.xlane.xlu0 %228
    %v230 = vsub.f32 %v195, %v226
    %v231 = vsub.f32 %v222, %v229
    %v232 = vmul.f32 %v230, 1.442695
    %v233 = vpow.pop %v232
    %v234 = vmul.f32 %v231, 1.442695
    %v235 = vpow.pop %v234
    %v236 = vsel %vm172, %v233, 0.0
    %237 = vadd.xlane.f32.xlu0 %v236
    %v238 = vpop.xlane.xlu0 %237
    %v239 = vsel %vm172, %v235, 0.0
    %240 = vadd.xlane.f32.xlu0 %v239
    %v241 = vpop.xlane.xlu0 %240
    %v242 = vrcp.pop %v238
    %v243 = vrcp.pop %v241
    %v244 = vmul.f32 %v233, %v242
    %v245 = vmul.f32 %v235, %v243
    %246 = vrot.lane.b32.xlu0 %v165, 64
    %v247 = vpop.permute.xlu0 %246
    %v250 = vsel %vm172, %v244, 0
    %252 = vmatpush.msra.mxu0 0.0
    %253 = vmatpush.msra.mxu0 0.0
    %254 = vmatpush.msra.mxu0 0.0
    %255 = vmatpush.msra.mxu0 0.0
    %256 = vmatpush.msra.mxu0 0.0
    %257 = vmatpush.msra.mxu0 0.0
    %258 = vmatpush.msra.mxu0 0.0
    %259 = vmatpush.msra.mxu0 0.0
    %260 = vmatpush.msra.mxu0 0.0
    %261 = vmatpush.msra.mxu0 0.0
    %262 = vmatpush.msra.mxu0 0.0
    %263 = vmatpush.msra.mxu0 0.0
    %264 = vmatpush.msra.mxu0 0.0
    %265 = vmatpush.msra.mxu0 0.0
    %266 = vmatpush.msra.mxu0 0.0
    %267 = vmatpush.msra.mxu0 %v247
    %268 = vmatmul.f32.gmra.mxu0 %v250
    %v269 = vpop.f32.mrf.mxu0
    %v270 = vadd.f32 0.0, %v269
    %271 = vdwg.mxu0
    %272 = vrot.lane.b32.xlu0 %v167, 64
    %v273 = vpop.permute.xlu0 %272
    %v276 = vsel %vm172, %v245, 0
    %278 = vmatpush.msra.mxu0 0.0
    %279 = vmatpush.msra.mxu0 0.0
    %280 = vmatpush.msra.mxu0 0.0
    %281 = vmatpush.msra.mxu0 0.0
    %282 = vmatpush.msra.mxu0 0.0
    %283 = vmatpush.msra.mxu0 0.0
    %284 = vmatpush.msra.mxu0 0.0
    %285 = vmatpush.msra.mxu0 0.0
    %286 = vmatpush.msra.mxu0 0.0
    %287 = vmatpush.msra.mxu0 0.0
    %288 = vmatpush.msra.mxu0 0.0
    %289 = vmatpush.msra.mxu0 0.0
    %290 = vmatpush.msra.mxu0 0.0
    %291 = vmatpush.msra.mxu0 0.0
    %292 = vmatpush.msra.mxu0 0.0
    %293 = vmatpush.msra.mxu0 %v273
    %294 = vmatmul.f32.gmra.mxu0 %v276
    %v295 = vpop.f32.mrf.mxu0
    %v296 = vadd.f32 0.0, %v295
    %297 = vdwg.mxu0
    %298 = vrot.lane.b32.xlu0 %v165, 120
    %v299 = vpop.permute.xlu0 %298
    %300 = vrot.lane.b32.xlu0 %v165, 88
    %v301 = vpop.permute.xlu0 %300
    %v302 = vsel %vm172, %v299, 0
    %v304 = vsel %vm172, %v301, 0
    %306 = vmatpush.xpose.msra.mxu0 0.0
    %307 = vmatpush.xpose.msra.mxu0 0.0
    %308 = vmatpush.xpose.msra.mxu0 0.0
    %309 = vmatpush.xpose.msra.mxu0 0.0
    %310 = vmatpush.xpose.msra.mxu0 0.0
    %311 = vmatpush.xpose.msra.mxu0 0.0
    %312 = vmatpush.xpose.msra.mxu0 0.0
    %313 = vmatpush.xpose.msra.mxu0 0.0
    %314 = vmatpush.xpose.msra.mxu0 0.0
    %315 = vmatpush.xpose.msra.mxu0 0.0
    %316 = vmatpush.xpose.msra.mxu0 0.0
    %317 = vmatpush.xpose.msra.mxu0 0.0
    %318 = vmatpush.xpose.msra.mxu0 0.0
    %319 = vmatpush.xpose.msra.mxu0 0.0
    %320 = vmatpush.xpose.msra.mxu0 0.0
    %321 = vmatpush.xpose.msra.mxu0 %v304
    %322 = vmatmul.f32.gmra.mxu0 %v302
    %v323 = vpop.f32.mrf.mxu0
    %v324 = vadd.f32 0.0, %v323
    %325 = vdwg.mxu0
    %326 = vrot.lane.b32.xlu0 %v167, 120
    %v327 = vpop.permute.xlu0 %326
    %328 = vrot.lane.b32.xlu0 %v167, 88
    %v329 = vpop.permute.xlu0 %328
    %v330 = vsel %vm172, %v327, 0
    %v332 = vsel %vm172, %v329, 0
    %334 = vmatpush.xpose.msra.mxu0 0.0
    %335 = vmatpush.xpose.msra.mxu0 0.0
    %336 = vmatpush.xpose.msra.mxu0 0.0
    %337 = vmatpush.xpose.msra.mxu0 0.0
    %338 = vmatpush.xpose.msra.mxu0 0.0
    %339 = vmatpush.xpose.msra.mxu0 0.0
    %340 = vmatpush.xpose.msra.mxu0 0.0
    %341 = vmatpush.xpose.msra.mxu0 0.0
    %342 = vmatpush.xpose.msra.mxu0 0.0
    %343 = vmatpush.xpose.msra.mxu0 0.0
    %344 = vmatpush.xpose.msra.mxu0 0.0
    %345 = vmatpush.xpose.msra.mxu0 0.0
    %346 = vmatpush.xpose.msra.mxu0 0.0
    %347 = vmatpush.xpose.msra.mxu0 0.0
    %348 = vmatpush.xpose.msra.mxu0 0.0
    %349 = vmatpush.xpose.msra.mxu0 %v332
    %350 = vmatmul.f32.gmra.mxu0 %v330
    %v351 = vpop.f32.mrf.mxu0
    %v352 = vadd.f32 0.0, %v351
    %353 = vdwg.mxu0
    %v354 = vsel %vm172, %v324, -inf
    %355 = vmax.xlane.f32.xlu0 %v354
    %v356 = vpop.xlane.xlu0 %355
    %v357 = vsel %vm172, %v352, -inf
    %358 = vmax.xlane.f32.xlu0 %v357
    %v359 = vpop.xlane.xlu0 %358
    %v360 = vsub.f32 %v324, %v356
    %v361 = vsub.f32 %v352, %v359
    %v362 = vmul.f32 %v360, 1.442695
    %v363 = vpow.pop %v362
    %v364 = vmul.f32 %v361, 1.442695
    %v365 = vpow.pop %v364
    %v366 = vsel %vm172, %v363, 0.0
    %367 = vadd.xlane.f32.xlu0 %v366
    %v368 = vpop.xlane.xlu0 %367
    %v369 = vsel %vm172, %v365, 0.0
    %370 = vadd.xlane.f32.xlu0 %v369
    %v371 = vpop.xlane.xlu0 %370
    %v372 = vrcp.pop %v368
    %v373 = vrcp.pop %v371
    %v374 = vmul.f32 %v363, %v372
    %v375 = vmul.f32 %v365, %v373
    %376 = vrot.lane.b32.xlu0 %v165, 56
    %v377 = vpop.permute.xlu0 %376
    %v380 = vsel %vm172, %v374, 0
    %382 = vmatpush.msra.mxu0 0.0
    %383 = vmatpush.msra.mxu0 0.0
    %384 = vmatpush.msra.mxu0 0.0
    %385 = vmatpush.msra.mxu0 0.0
    %386 = vmatpush.msra.mxu0 0.0
    %387 = vmatpush.msra.mxu0 0.0
    %388 = vmatpush.msra.mxu0 0.0
    %389 = vmatpush.msra.mxu0 0.0
    %390 = vmatpush.msra.mxu0 0.0
    %391 = vmatpush.msra.mxu0 0.0
    %392 = vmatpush.msra.mxu0 0.0
    %393 = vmatpush.msra.mxu0 0.0
    %394 = vmatpush.msra.mxu0 0.0
    %395 = vmatpush.msra.mxu0 0.0
    %396 = vmatpush.msra.mxu0 0.0
    %397 = vmatpush.msra.mxu0 %v377
    %398 = vmatmul.f32.gmra.mxu0 %v380
    %v399 = vpop.f32.mrf.mxu0
    %v400 = vadd.f32 0.0, %v399
    %401 = vdwg.mxu0
    %402 = vrot.lane.b32.xlu0 %v167, 56
    %v403 = vpop.permute.xlu0 %402
    %v406 = vsel %vm172, %v375, 0
    %408 = vmatpush.msra.mxu0 0.0
    %409 = vmatpush.msra.mxu0 0.0
    %410 = vmatpush.msra.mxu0 0.0
    %411 = vmatpush.msra.mxu0 0.0
    %412 = vmatpush.msra.mxu0 0.0
    %413 = vmatpush.msra.mxu0 0.0
    %414 = vmatpush.msra.mxu0 0.0
    %415 = vmatpush.msra.mxu0 0.0
    %416 = vmatpush.msra.mxu0 0.0
    %417 = vmatpush.msra.mxu0 0.0
    %418 = vmatpush.msra.mxu0 0.0
    %419 = vmatpush.msra.mxu0 0.0
    %420 = vmatpush.msra.mxu0 0.0
    %421 = vmatpush.msra.mxu0 0.0
    %422 = vmatpush.msra.mxu0 0.0
    %423 = vmatpush.msra.mxu0 %v403
    %424 = vmatmul.f32.gmra.mxu0 %v406
    %v425 = vpop.f32.mrf.mxu0
    %v426 = vadd.f32 0.0, %v425
    %427 = vdwg.mxu0
    %428 = vrot.lane.b32.xlu0 %v165, 112
    %v429 = vpop.permute.xlu0 %428
    %430 = vrot.lane.b32.xlu0 %v165, 80
    %v431 = vpop.permute.xlu0 %430
    %v432 = vsel %vm172, %v429, 0
    %v434 = vsel %vm172, %v431, 0
    %436 = vmatpush.xpose.msra.mxu0 0.0
    %437 = vmatpush.xpose.msra.mxu0 0.0
    %438 = vmatpush.xpose.msra.mxu0 0.0
    %439 = vmatpush.xpose.msra.mxu0 0.0
    %440 = vmatpush.xpose.msra.mxu0 0.0
    %441 = vmatpush.xpose.msra.mxu0 0.0
    %442 = vmatpush.xpose.msra.mxu0 0.0
    %443 = vmatpush.xpose.msra.mxu0 0.0
    %444 = vmatpush.xpose.msra.mxu0 0.0
    %445 = vmatpush.xpose.msra.mxu0 0.0
    %446 = vmatpush.xpose.msra.mxu0 0.0
    %447 = vmatpush.xpose.msra.mxu0 0.0
    %448 = vmatpush.xpose.msra.mxu0 0.0
    %449 = vmatpush.xpose.msra.mxu0 0.0
    %450 = vmatpush.xpose.msra.mxu0 0.0
    %451 = vmatpush.xpose.msra.mxu0 %v434
    %452 = vmatmul.f32.gmra.mxu0 %v432
    %v453 = vpop.f32.mrf.mxu0
    %v454 = vadd.f32 0.0, %v453
    %455 = vdwg.mxu0
    %456 = vrot.lane.b32.xlu0 %v167, 112
    %v457 = vpop.permute.xlu0 %456
    %458 = vrot.lane.b32.xlu0 %v167, 80
    %v459 = vpop.permute.xlu0 %458
    %v460 = vsel %vm172, %v457, 0
    %v462 = vsel %vm172, %v459, 0
    %464 = vmatpush.xpose.msra.mxu0 0.0
    %465 = vmatpush.xpose.msra.mxu0 0.0
    %466 = vmatpush.xpose.msra.mxu0 0.0
    %467 = vmatpush.xpose.msra.mxu0 0.0
    %468 = vmatpush.xpose.msra.mxu0 0.0
    %469 = vmatpush.xpose.msra.mxu0 0.0
    %470 = vmatpush.xpose.msra.mxu0 0.0
    %471 = vmatpush.xpose.msra.mxu0 0.0
    %472 = vmatpush.xpose.msra.mxu0 0.0
    %473 = vmatpush.xpose.msra.mxu0 0.0
    %474 = vmatpush.xpose.msra.mxu0 0.0
    %475 = vmatpush.xpose.msra.mxu0 0.0
    %476 = vmatpush.xpose.msra.mxu0 0.0
    %477 = vmatpush.xpose.msra.mxu0 0.0
    %478 = vmatpush.xpose.msra.mxu0 0.0
    %479 = vmatpush.xpose.msra.mxu0 %v462
    %480 = vmatmul.f32.gmra.mxu0 %v460
    %v481 = vpop.f32.mrf.mxu0
    %v482 = vadd.f32 0.0, %v481
    %483 = vdwg.mxu0
    %v484 = vsel %vm172, %v454, -inf
    %485 = vmax.xlane.f32.xlu0 %v484
    %v486 = vpop.xlane.xlu0 %485
    %v487 = vsel %vm172, %v482, -inf
    %488 = vmax.xlane.f32.xlu0 %v487
    %v489 = vpop.xlane.xlu0 %488
    %v490 = vsub.f32 %v454, %v486
    %v491 = vsub.f32 %v482, %v489
    %v492 = vmul.f32 %v490, 1.442695
    %v493 = vpow.pop %v492
    %v494 = vmul.f32 %v491, 1.442695
    %v495 = vpow.pop %v494
    %v496 = vsel %vm172, %v493, 0.0
    %497 = vadd.xlane.f32.xlu0 %v496
    %v498 = vpop.xlane.xlu0 %497
    %v499 = vsel %vm172, %v495, 0.0
    %500 = vadd.xlane.f32.xlu0 %v499
    %v501 = vpop.xlane.xlu0 %500
    %v502 = vrcp.pop %v498
    %v503 = vrcp.pop %v501
    %v504 = vmul.f32 %v493, %v502
    %v505 = vmul.f32 %v495, %v503
    %506 = vrot.lane.b32.xlu0 %v165, 48
    %v507 = vpop.permute.xlu0 %506
    %v510 = vsel %vm172, %v504, 0
    %512 = vmatpush.msra.mxu0 0.0
    %513 = vmatpush.msra.mxu0 0.0
    %514 = vmatpush.msra.mxu0 0.0
    %515 = vmatpush.msra.mxu0 0.0
    %516 = vmatpush.msra.mxu0 0.0
    %517 = vmatpush.msra.mxu0 0.0
    %518 = vmatpush.msra.mxu0 0.0
    %519 = vmatpush.msra.mxu0 0.0
    %520 = vmatpush.msra.mxu0 0.0
    %521 = vmatpush.msra.mxu0 0.0
    %522 = vmatpush.msra.mxu0 0.0
    %523 = vmatpush.msra.mxu0 0.0
    %524 = vmatpush.msra.mxu0 0.0
    %525 = vmatpush.msra.mxu0 0.0
    %526 = vmatpush.msra.mxu0 0.0
    %527 = vmatpush.msra.mxu0 %v507
    %528 = vmatmul.f32.gmra.mxu0 %v510
    %v529 = vpop.f32.mrf.mxu0
    %v530 = vadd.f32 0.0, %v529
    %531 = vdwg.mxu0
    %532 = vrot.lane.b32.xlu0 %v167, 48
    %v533 = vpop.permute.xlu0 %532
    %v536 = vsel %vm172, %v505, 0
    %538 = vmatpush.msra.mxu0 0.0
    %539 = vmatpush.msra.mxu0 0.0
    %540 = vmatpush.msra.mxu0 0.0
    %541 = vmatpush.msra.mxu0 0.0
    %542 = vmatpush.msra.mxu0 0.0
    %543 = vmatpush.msra.mxu0 0.0
    %544 = vmatpush.msra.mxu0 0.0
    %545 = vmatpush.msra.mxu0 0.0
    %546 = vmatpush.msra.mxu0 0.0
    %547 = vmatpush.msra.mxu0 0.0
    %548 = vmatpush.msra.mxu0 0.0
    %549 = vmatpush.msra.mxu0 0.0
    %550 = vmatpush.msra.mxu0 0.0
    %551 = vmatpush.msra.mxu0 0.0
    %552 = vmatpush.msra.mxu0 0.0
    %553 = vmatpush.msra.mxu0 %v533
    %554 = vmatmul.f32.gmra.mxu0 %v536
    %v555 = vpop.f32.mrf.mxu0
    %v556 = vadd.f32 0.0, %v555
    %557 = vdwg.mxu0
    %558 = vrot.lane.b32.xlu0 %v165, 104
    %v559 = vpop.permute.xlu0 %558
    %560 = vrot.lane.b32.xlu0 %v165, 72
    %v561 = vpop.permute.xlu0 %560
    %v562 = vsel %vm172, %v559, 0
    %v564 = vsel %vm172, %v561, 0
    %566 = vmatpush.xpose.msra.mxu0 0.0
    %567 = vmatpush.xpose.msra.mxu0 0.0
    %568 = vmatpush.xpose.msra.mxu0 0.0
    %569 = vmatpush.xpose.msra.mxu0 0.0
    %570 = vmatpush.xpose.msra.mxu0 0.0
    %571 = vmatpush.xpose.msra.mxu0 0.0
    %572 = vmatpush.xpose.msra.mxu0 0.0
    %573 = vmatpush.xpose.msra.mxu0 0.0
    %574 = vmatpush.xpose.msra.mxu0 0.0
    %575 = vmatpush.xpose.msra.mxu0 0.0
    %576 = vmatpush.xpose.msra.mxu0 0.0
    %577 = vmatpush.xpose.msra.mxu0 0.0
    %578 = vmatpush.xpose.msra.mxu0 0.0
    %579 = vmatpush.xpose.msra.mxu0 0.0
    %580 = vmatpush.xpose.msra.mxu0 0.0
    %581 = vmatpush.xpose.msra.mxu0 %v564
    %582 = vmatmul.f32.gmra.mxu0 %v562
    %v583 = vpop.f32.mrf.mxu0
    %v584 = vadd.f32 0.0, %v583
    %585 = vdwg.mxu0
    %586 = vrot.lane.b32.xlu0 %v167, 104
    %v587 = vpop.permute.xlu0 %586
    %588 = vrot.lane.b32.xlu0 %v167, 72
    %v589 = vpop.permute.xlu0 %588
    %v590 = vsel %vm172, %v587, 0
    %v592 = vsel %vm172, %v589, 0
    %594 = vmatpush.xpose.msra.mxu0 0.0
    %595 = vmatpush.xpose.msra.mxu0 0.0
    %596 = vmatpush.xpose.msra.mxu0 0.0
    %597 = vmatpush.xpose.msra.mxu0 0.0
    %598 = vmatpush.xpose.msra.mxu0 0.0
    %599 = vmatpush.xpose.msra.mxu0 0.0
    %600 = vmatpush.xpose.msra.mxu0 0.0
    %601 = vmatpush.xpose.msra.mxu0 0.0
    %602 = vmatpush.xpose.msra.mxu0 0.0
    %603 = vmatpush.xpose.msra.mxu0 0.0
    %604 = vmatpush.xpose.msra.mxu0 0.0
    %605 = vmatpush.xpose.msra.mxu0 0.0
    %606 = vmatpush.xpose.msra.mxu0 0.0
    %607 = vmatpush.xpose.msra.mxu0 0.0
    %608 = vmatpush.xpose.msra.mxu0 0.0
    %609 = vmatpush.xpose.msra.mxu0 %v592
    %610 = vmatmul.f32.gmra.mxu0 %v590
    %v611 = vpop.f32.mrf.mxu0
    %v612 = vadd.f32 0.0, %v611
    %613 = vdwg.mxu0
    %v614 = vsel %vm172, %v584, -inf
    %615 = vmax.xlane.f32.xlu0 %v614
    %v616 = vpop.xlane.xlu0 %615
    %v617 = vsel %vm172, %v612, -inf
    %618 = vmax.xlane.f32.xlu0 %v617
    %v619 = vpop.xlane.xlu0 %618
    %v620 = vsub.f32 %v584, %v616
    %v621 = vsub.f32 %v612, %v619
    %v622 = vmul.f32 %v620, 1.442695
    %v623 = vpow.pop %v622
    %v624 = vmul.f32 %v621, 1.442695
    %v625 = vpow.pop %v624
    %v626 = vsel %vm172, %v623, 0.0
    %627 = vadd.xlane.f32.xlu0 %v626
    %v628 = vpop.xlane.xlu0 %627
    %v629 = vsel %vm172, %v625, 0.0
    %630 = vadd.xlane.f32.xlu0 %v629
    %v631 = vpop.xlane.xlu0 %630
    %v632 = vrcp.pop %v628
    %v633 = vrcp.pop %v631
    %v634 = vmul.f32 %v623, %v632
    %v635 = vmul.f32 %v625, %v633
    %636 = vrot.lane.b32.xlu0 %v165, 40
    %v637 = vpop.permute.xlu0 %636
    %v640 = vsel %vm172, %v634, 0
    %642 = vmatpush.msra.mxu0 0.0
    %643 = vmatpush.msra.mxu0 0.0
    %644 = vmatpush.msra.mxu0 0.0
    %645 = vmatpush.msra.mxu0 0.0
    %646 = vmatpush.msra.mxu0 0.0
    %647 = vmatpush.msra.mxu0 0.0
    %648 = vmatpush.msra.mxu0 0.0
    %649 = vmatpush.msra.mxu0 0.0
    %650 = vmatpush.msra.mxu0 0.0
    %651 = vmatpush.msra.mxu0 0.0
    %652 = vmatpush.msra.mxu0 0.0
    %653 = vmatpush.msra.mxu0 0.0
    %654 = vmatpush.msra.mxu0 0.0
    %655 = vmatpush.msra.mxu0 0.0
    %656 = vmatpush.msra.mxu0 0.0
    %657 = vmatpush.msra.mxu0 %v637
    %658 = vmatmul.f32.gmra.mxu0 %v640
    %v659 = vpop.f32.mrf.mxu0
    %v660 = vadd.f32 0.0, %v659
    %661 = vdwg.mxu0
    %662 = vrot.lane.b32.xlu0 %v167, 40
    %v663 = vpop.permute.xlu0 %662
    %v666 = vsel %vm172, %v635, 0
    %668 = vmatpush.msra.mxu0 0.0
    %669 = vmatpush.msra.mxu0 0.0
    %670 = vmatpush.msra.mxu0 0.0
    %671 = vmatpush.msra.mxu0 0.0
    %672 = vmatpush.msra.mxu0 0.0
    %673 = vmatpush.msra.mxu0 0.0
    %674 = vmatpush.msra.mxu0 0.0
    %675 = vmatpush.msra.mxu0 0.0
    %676 = vmatpush.msra.mxu0 0.0
    %677 = vmatpush.msra.mxu0 0.0
    %678 = vmatpush.msra.mxu0 0.0
    %679 = vmatpush.msra.mxu0 0.0
    %680 = vmatpush.msra.mxu0 0.0
    %681 = vmatpush.msra.mxu0 0.0
    %682 = vmatpush.msra.mxu0 0.0
    %683 = vmatpush.msra.mxu0 %v663
    %684 = vmatmul.f32.gmra.mxu0 %v666
    %v685 = vpop.f32.mrf.mxu0
    %v686 = vadd.f32 0.0, %v685
    %687 = vdwg.mxu0
    %690 = vrot.lane.b32.xlu0 %v400, 8
    %v691 = vpop.permute.xlu0 %690
    %692 = vrot.lane.b32.xlu0 %v426, 8
    %v693 = vpop.permute.xlu0 %692
    %698 = vrot.lane.b32.xlu0 %v530, 16
    %v699 = vpop.permute.xlu0 %698
    %700 = vrot.lane.b32.xlu0 %v556, 16
    %v701 = vpop.permute.xlu0 %700
    %706 = vrot.lane.b32.xlu0 %v660, 24
    %v707 = vpop.permute.xlu0 %706
    %708 = vrot.lane.b32.xlu0 %v686, 24
    %v709 = vpop.permute.xlu0 %708
    %v712 = vsel %vm172, %v270, %v691
    %v713 = vsel %vm172, %v296, %v693
    %vm714 = vcmask 130048
    %v715 = vsel %vm714, %v712, %v699
    %v716 = vsel %vm714, %v713, %v701
    %vm717 = vcmask 195584
    %v718 = vsel %vm717, %v715, %v707
    %v719 = vsel %vm717, %v716, %v709
    %v720 = vpack.c.bf16 %v719, %v718
    %v721 = vld [vmem:[%s3] sm:$0xf]
    %v722 = vld [vmem:[%s3 + $0x4] sm:$0xf]
    %v723 = vld [vmem:[%s3 + $0x8] sm:$0xf]
    %v724 = vld [vmem:[%s3 + $0xc] sm:$0xf]
    %v729 = vunpack.c.l.b16 %v721
    %v730 = vunpack.c.l.b16 %v722
    %v731 = vunpack.c.l.b16 %v723
    %v732 = vunpack.c.l.b16 %v724
    %v733 = vpack.c.b16 %v730, %v729
    %v734 = vpack.c.b16 %v732, %v731
    %v738 = vsel %vm79, %v720, 0
    %740 = vmatpush.bf16.msra.mxu0 0
    %741 = vmatpush.bf16.msra.mxu0 0
    %742 = vmatpush.bf16.msra.mxu0 0
    %743 = vmatpush.bf16.msra.mxu0 0
    %744 = vmatpush.bf16.msra.mxu0 0
    %745 = vmatpush.bf16.msra.mxu0 0
    %746 = vmatpush.bf16.msra.mxu0 %v734
    %747 = vmatpush.bf16.msra.mxu0 %v733
    %748 = vmatmul.bf16.gmra.mxu0 %v738
    %v749 = vpop.f32.mrf.mxu0
    %v750 = vadd.f32 0.0, %v749
    %v751 = vpop.f32.mrf.mxu0
    %v752 = vadd.f32 0.0, %v751
    %753 = vdwg.mxu0
    %v754 = vadd.f32 %v77, %v750
    %v755 = vadd.f32 %v78, %v752
    %v756 = vld [vmem:[%s4] sm:$0x1]
    %v758 = vperm.slane %v756, 0
    %v760 = vadd.f32 %v754, %v758
    %v761 = vadd.f32 %v755, %v758
    %v762 = vsel %vm79, %v760, 0.0
    %763 = vadd.xlane.f32.xlu0 %v762
    %v764 = vpop.xlane.xlu0 %763
    %v765 = vsel %vm79, %v761, 0.0
    %766 = vadd.xlane.f32.xlu0 %v765
    %v767 = vpop.xlane.xlu0 %766
    %v768 = vmul.f32 %v764, %v92
    %v769 = vmul.f32 %v767, %v92
    %v770 = vsub.f32 %v760, %v768
    %v771 = vsub.f32 %v761, %v769
    %v772 = vmul.f32 %v770, %v770
    %v773 = vmul.f32 %v771, %v771
    %v774 = vsel %vm79, %v772, 0.0
    %775 = vadd.xlane.f32.xlu0 %v774
    %v776 = vpop.xlane.xlu0 %775
    %v777 = vsel %vm79, %v773, 0.0
    %778 = vadd.xlane.f32.xlu0 %v777
    %v779 = vpop.xlane.xlu0 %778
    %v780 = vmul.f32 %v776, %v92
    %v781 = vmul.f32 %v779, %v92
    %v782 = vadd.f32 %v780, 1e-05
    %v783 = vadd.f32 %v781, 1e-05
    %v784 = vrsqrt.pop %v782
    %v785 = vmul.f32 %v784, %v782
    %v786 = vmul.f32 %v785, %v784
    %v787 = vmul.f32 0.5, %v786
    %v788 = vsub.f32 1.5, %v787
    %v789 = vmul.f32 %v784, %v788
    %vm790 = vweird.f32 %v782
    %vm791 = vweird.f32 %v784
    %vm792 = vmor %vm790, %vm791
    %v793 = vsel %vm792, %v784, %v789
    %v794 = vrsqrt.pop %v783
    %v795 = vmul.f32 %v794, %v783
    %v796 = vmul.f32 %v795, %v794
    %v797 = vmul.f32 0.5, %v796
    %v798 = vsub.f32 1.5, %v797
    %v799 = vmul.f32 %v794, %v798
    %vm800 = vweird.f32 %v783
    %vm801 = vweird.f32 %v794
    %vm802 = vmor %vm800, %vm801
    %v803 = vsel %vm802, %v794, %v799
    %v804 = vmul.f32 %v770, %v793
    %v805 = vmul.f32 %v771, %v803
    %v806 = vpack.c.bf16 %v805, %v804
    %v807 = vld [vmem:[#allocation2] sm:$0xf]
    %v808 = vld [vmem:[#allocation2 + $0x4] sm:$0xf]
    %v809 = vld [vmem:[#allocation2 + $0x8] sm:$0xf]
    %v810 = vld [vmem:[#allocation2 + $0xc] sm:$0xf]
    %v811 = vld [vmem:[#allocation5] sm:$0x1]
    %v813 = vperm.slane %v811, 0
    %v819 = vunpack.c.l.b16 %v807
    %v820 = vunpack.c.l.b16 %v808
    %v821 = vunpack.c.l.b16 %v809
    %v822 = vunpack.c.l.b16 %v810
    %v823 = vpack.c.b16 %v820, %v819
    %v824 = vpack.c.b16 %v822, %v821
    %v828 = vsel %vm79, %v806, 0
    %830 = vmatpush.bf16.msra.mxu0 0
    %831 = vmatpush.bf16.msra.mxu0 0
    %832 = vmatpush.bf16.msra.mxu0 0
    %833 = vmatpush.bf16.msra.mxu0 0
    %834 = vmatpush.bf16.msra.mxu0 0
    %835 = vmatpush.bf16.msra.mxu0 0
    %836 = vmatpush.bf16.msra.mxu0 %v824
    %837 = vmatpush.bf16.msra.mxu0 %v823
    %838 = vmatmul.bf16.gmra.mxu0 %v828
    %v839 = vpop.f32.mrf.mxu0
    %v840 = vadd.f32 %v813, %v839
    %v841 = vpop.f32.mrf.mxu0
    %v842 = vadd.f32 %v813, %v841
    %843 = vdwg.mxu0
    %v844 = vmax.f32 %v840, 0.0
    %v845 = vmax.f32 %v842, 0.0
    %v846 = vpack.c.bf16 %v845, %v844
    %v847 = vld [vmem:[%s7] sm:$0xf]
    %v848 = vld [vmem:[%s7 + $0x4] sm:$0xf]
    %v849 = vld [vmem:[%s7 + $0x8] sm:$0xf]
    %v850 = vld [vmem:[%s7 + $0xc] sm:$0xf]
    %v851 = vld [vmem:[%s7 + $0x10] sm:$0xf]
    %v852 = vld [vmem:[%s7 + $0x14] sm:$0xf]
    %v853 = vld [vmem:[%s7 + $0x18] sm:$0xf]
    %v854 = vld [vmem:[%s7 + $0x1c] sm:$0xf]
    %v855 = vld [vmem:[#allocation7] sm:$0x1]
    %v857 = vperm.slane %v855, 0
    %v867 = vunpack.c.l.b16 %v847
    %v868 = vunpack.c.l.b16 %v848
    %v869 = vunpack.c.l.b16 %v849
    %v870 = vunpack.c.l.b16 %v850
    %v871 = vunpack.c.l.b16 %v851
    %v872 = vunpack.c.l.b16 %v852
    %v873 = vunpack.c.l.b16 %v853
    %v874 = vunpack.c.l.b16 %v854
    %v875 = vpack.c.b16 %v868, %v867
    %v876 = vpack.c.b16 %v870, %v869
    %v877 = vpack.c.b16 %v872, %v871
    %v878 = vpack.c.b16 %v874, %v873
    %vm883 = vcmask 523264
    %v885 = vsel %vm883, %v846, 0
    %887 = vmatpush.bf16.msra.mxu0 0
    %888 = vmatpush.bf16.msra.mxu0 0
    %889 = vmatpush.bf16.msra.mxu0 0
    %890 = vmatpush.bf16.msra.mxu0 0
    %891 = vmatpush.bf16.msra.mxu0 %v878
    %892 = vmatpush.bf16.msra.mxu0 %v877
    %893 = vmatpush.bf16.msra.mxu0 %v876
    %894 = vmatpush.bf16.msra.mxu0 %v875
    %895 = vmatmul.bf16.gmra.mxu0 %v885
    %v896 = vpop.f32.mrf.mxu0
    %v897 = vadd.f32 %v857, %v896
    %v898 = vpop.f32.mrf.mxu0
    %v899 = vadd.f32 %v857, %v898
    %900 = vdwg.mxu0
    %v901 = vadd.f32 %v760, %v897
    %v902 = vadd.f32 %v761, %v899
    %903 = vst.msk [vmem:[#allocation8] sm:$0xff] %vm79, %v901
    %904 = vst.msk [vmem:[#allocation8 + $0x8] sm:$0xff] %vm79, %v902
    // Predicated region
    $region50: #{encoder_block.1} parent=1 // pred_check
      _
    $region51: #{encoder_block.1} parent=1 // pred_check_branch
      %906 = sbr.rel (0) target = $region53
    $region52: #{encoder_block.1} parent=1 // pred_region
      %908 = vsyncadd [#allocation4], 0
      %s909 = sshll.u32 [#allocation8], 4
      %s910 = int_to_ptr.vmem [resolvable:$true] %s909
      %s911 = sshll.u32 %s9, 4
      %s912 = int_to_ptr.hbm [resolvable:$true] %s911
      %917 = dma.vmem_to_hbm [thread:$0]  %s910, 256, %s912, [#allocation4], 128, 128, 8
    $region53: #{encoder_block.1} parent=1 // pred_fallthru
      _
    // Predicated region
    $region54: #{encoder_block.1} parent=1 // pred_check
      _
    $region55: #{encoder_block.1} parent=1 // pred_check_branch
      %919 = sbr.rel (0) target = $region57
    $region56: #{encoder_block.1} parent=1 // pred_region
      %921 = dma.done [#allocation4], 256
    $region57: #{encoder_block.1} parent=1 // pred_fallthru
      _
    %922 = vsyncpa [#allocation3], 1
    %923 = vsyncpa [#allocation6], 1
    %924 = vsyncpa [#allocation4], 1

</llo_original>
